<compile_context>
chip_gen: v7x
topology: tpu7x:2x2x1
jax: 0.10.0
libtpu: 0.0.40
codegen_flags: <defaults>
</compile_context>

<pallas_src>
import math

import jax
import jax.numpy as jnp
from jax.experimental import pallas as pl
from jax.experimental.pallas import tpu as pltpu

_INV_LN10 = 1.0 / math.log(10.0)


def _round_up(x: int, m: int) -> int:
    return ((x + m - 1) // m) * m


def _largest_divisor_leq(n: int, cap: int) -> int:
    """Largest divisor of n that is <= cap (n, cap >= 1)."""
    d = max(1, min(n, cap))
    while n % d:
        d -= 1
    return d


def _device_config():
    """Return (vmem_block_budget_bytes, vmem_limit_bytes, multi_core)."""
    kind = ""
    try:
        kind = jax.devices()[0].device_kind.lower()
    except Exception:
        pass
    if any(g in kind for g in ("v2", "v3", "v4", "v5", "v6")):
        # 128 MiB physical VMEM, single TensorCore per chip.
        return 80 << 20, 100 << 20, False
    # v7x (64 MiB physical / 32 MiB scoped, 2 TensorCores) or unknown: conservative.
    return 20 << 20, 32 << 20, True


def _choose_tiles(B, in_p, out_p, x_bytes, w_bytes, budget, multi_core):
    """Pick (tm, tn, tk) and grid extents (nm, nn, nk).

    tn / tk are 128-multiples that exactly divide out_p / in_p (so the K
    reduction never reads garbage padding); tm fills the remaining VMEM budget
    (cap 2048) to amortize the ~0.35us per-grid-step overhead.
    """
    out_units = out_p // 128
    in_units = in_p // 128

    # N tile: lane-dense, at most 1024 lanes.
    tn = 128 * _largest_divisor_leq(out_units, 8)

    # K tile: keep double-buffered W blocks within ~1/3 of the budget.
    tk_max_elems = max(128, (budget // 3) // max(1, 2 * tn * w_bytes))
    tk = 128 * _largest_divisor_leq(in_units, max(1, tk_max_elems // 128))

    # Batch tile: fill what is left (x double-buffered, out double-buffered,
    # f32 accumulator), capped at 2048 rows and at the (8-aligned) batch size.
    fixed = 2 * tk * tn * w_bytes + 2 * tn * 4          # W + bt buffers
    per_row = 2 * tk * x_bytes + 3 * tn * 4             # x + out + acc
    tm_mem = ((budget - fixed) // per_row // 8) * 8
    tm = max(8, min(2048, tm_mem, _round_up(B, 8)))

    nm = (B + tm - 1) // tm
    nn = out_p // tn
    nk = in_p // tk

    # Dual-TensorCore parts: guarantee >= 2 parallel grid steps when possible.
    if multi_core and nm * nn < 2 and _round_up(B, 8) >= 16:
        tm = max(8, _round_up((B + 1) // 2, 8))
        nm = (B + tm - 1) // tm

    return tm, tn, tk, nm, nn, nk


def hsm_cortical_block_kernel(x_ref, w_ref, bt_ref, o_ref, acc_ref):
    k = pl.program_id(2)

    @pl.when(k == 0)
    def _init():
        acc_ref[...] = jnp.zeros_like(acc_ref)

    # (tm, tk) @ (tk, tn) on the MXU, f32 accumulation. W is already (K, N).
    acc_ref[...] += jnp.dot(
        x_ref[...], w_ref[...], preferred_element_type=jnp.float32
    )

    @pl.when(k == pl.num_programs(2) - 1)
    def _finalize():
        # Fused (bias - thresholds), broadcast over the batch (sublane) axis.
        z = acc_ref[...] + bt_ref[...]
        # Numerically stable log10(1 + exp(z)) == softplus(z) / ln(10).
        softplus = jnp.maximum(z, 0.0) + jnp.log(1.0 + jnp.exp(-jnp.abs(z)))
        o_ref[...] = (softplus * _INV_LN10).astype(o_ref.dtype)


def hsm_cortical_block(x, weight, bias, thresholds, *, use_bf16_matmul=True):
    """x: (B, in), weight: (out, in) [PyTorch layout], bias: (out,), thresholds: (1, out).

    Returns float32 (B, out) = log10(1 + exp(x @ weight.T + bias - thresholds)).
    """
    B, in_size = x.shape
    out_size = weight.shape[0]

    in_p = _round_up(in_size, 128)
    out_p = _round_up(out_size, 128)

    mat_dtype = jnp.bfloat16 if use_bf16_matmul else x.dtype
    x_bytes = jnp.dtype(mat_dtype).itemsize
    w_bytes = x_bytes

    # Fused bias - thresholds (stays f32; added after the f32 accumulation).
    bt = bias.reshape(1, out_size).astype(jnp.float32) - thresholds.reshape(
        1, out_size
    ).astype(jnp.float32)
    if out_p != out_size:
        bt = jnp.pad(bt, ((0, 0), (0, out_p - out_size)))

    # Weight: cast, zero-pad, and pre-transpose ONCE to the MXU-canonical (K, N).
    # (In real use the parameter should be stored pre-transposed/padded.)
    w = weight.astype(mat_dtype)
    if in_p != in_size or out_p != out_size:
        w = jnp.pad(w, ((0, out_p - out_size), (0, in_p - in_size)))
    w_t = w.T  # (in_p, out_p)

    # x: cast and zero-pad the feature (lane) axis only; rows are never padded.
    x_m = x.astype(mat_dtype)
    if in_p != in_size:
        x_m = jnp.pad(x_m, ((0, 0), (0, in_p - in_size)))

    budget, vmem_limit, multi_core = _device_config()
    tm, tn, tk, nm, nn, nk = _choose_tiles(
        B, in_p, out_p, x_bytes, w_bytes, budget, multi_core
    )

    cost = pl.CostEstimate(
        flops=2 * B * in_p * out_p,
        transcendentals=2 * B * out_p,
        bytes_accessed=(
            nn * B * in_p * x_bytes          # x streamed once per N tile
            + nm * in_p * out_p * w_bytes    # W streamed once per M tile
            + B * out_p * 4                  # output
            + out_p * 4                      # bias - thresholds
        ),
    )

    out = pl.pallas_call(
        hsm_cortical_block_kernel,
        out_shape=jax.ShapeDtypeStruct((B, out_p), jnp.float32),
        grid_spec=pltpu.PrefetchScalarGridSpec(
            num_scalar_prefetch=0,
            grid=(nm, nn, nk),
            in_specs=[
                pl.BlockSpec((tm, tk), lambda i, j, k: (i, k)),   # x tile
                pl.BlockSpec((tk, tn), lambda i, j, k: (k, j)),   # W (K, N) tile
                pl.BlockSpec((1, tn), lambda i, j, k: (0, j)),    # bias - thresholds
            ],
            out_specs=pl.BlockSpec((tm, tn), lambda i, j, k: (i, j)),
            scratch_shapes=[pltpu.VMEM((tm, tn), jnp.float32)],   # f32 accumulator
        ),
        compiler_params=pltpu.CompilerParams(
            dimension_semantics=("parallel", "parallel", "arbitrary"),
            vmem_limit_bytes=vmem_limit,
            allow_input_fusion=[True, False, False],  # let a jitted caller fuse x pad/cast
        ),
        cost_estimate=cost,
    )(x_m, w_t, bt)

    return out if out_p == out_size else out[:, :out_size]


def _reference(x, weight, bias, thresholds):
    z = x @ weight.T + bias[None, :]
    return jnp.log10(1.0 + jnp.exp(z - thresholds))


if __name__ == "__main__":
    key = jax.random.PRNGKey(0)
    k_x, k_w, k_b, k_t = jax.random.split(key, 4)

    batch = 10          # deliberately not a multiple of 8: exercises ragged tiles
    input_size = 32     # e.g. num_lgn_units
    output_size = 16    # e.g. hidden_units_fraction * num_neurons

    # Deterministic synthetic parameters (shapes follow the module __init__).
    x = jax.random.normal(k_x, (batch, input_size), dtype=jnp.float32)
    bound = 1.0 / math.sqrt(input_size)
    weight = jax.random.uniform(k_w, (output_size, input_size),
                                minval=-bound, maxval=bound, dtype=jnp.float32)
    bias = jax.random.uniform(k_b, (output_size,),
                              minval=-bound, maxval=bound, dtype=jnp.float32)
    # nn.Parameter(...).uniform_() -> U[0, 1)
    thresholds = jax.random.uniform(k_t, (1, output_size), dtype=jnp.float32)

    ref = _reference(x, weight, bias, thresholds)

    # f32 MXU path: tight tolerance against the reference.
    out_f32 = jax.block_until_ready(
        hsm_cortical_block(x, weight, bias, thresholds, use_bf16_matmul=False)
    )
    assert out_f32.shape == (batch, output_size)
    assert jnp.allclose(out_f32, ref, atol=1e-5, rtol=1e-5)

    # Default bf16-operand MXU path (f32 accumulation/activation): looser tolerance.
    out_bf16 = jax.block_until_ready(
        hsm_cortical_block(x, weight, bias, thresholds)
    )
    assert out_bf16.shape == (batch, output_size)
    assert jnp.allclose(out_bf16, ref, atol=2e-2, rtol=2e-2)

    print("KERNEL_OK")
</pallas_src>

<mosaic_0001>
module attributes {stable_mosaic.version = 11 : i64} {
  func.func @hsm_cortical_block_kernel(%arg0: i32, %arg1: i32, %arg2: i32, %arg3: memref<8x128xf32, #tpu.memory_space<vmem>>, %arg4: memref<128x128xf32, #tpu.memory_space<vmem>>, %arg5: memref<1x128xf32, #tpu.memory_space<vmem>>, %arg6: memref<8x128xf32, #tpu.memory_space<vmem>>, %arg7: memref<8x128xf32, #tpu.memory_space<vmem>>) attributes {dimension_semantics = [#tpu.dimension_semantics<parallel>, #tpu.dimension_semantics<parallel>, #tpu.dimension_semantics<arbitrary>], iteration_bounds = array<i64: 2, 1, 1>, scalar_prefetch = 0 : i64, scratch_operands = 1 : i64, tpu.core_type = #tpu.core_type<tc>, window_params = [{transform_indices = @transform_0, window_bounds = array<i64: 8, 128>}, {transform_indices = @transform_1, window_bounds = array<i64: 128, 128>}, {transform_indices = @transform_2, window_bounds = array<i64: 1, 128>}, {transform_indices = @transform_3, window_bounds = array<i64: 8, 128>}]} {
    %c0_i32 = arith.constant 0 : i32
    %0 = arith.cmpi eq, %arg2, %c0_i32 : i32
    %1 = arith.extui %0 : i1 to i32
    %c0_i32_0 = arith.constant 0 : i32
    %2 = arith.cmpi ne, %1, %c0_i32_0 : i32
    scf.if %2 {
      %cst_10 = arith.constant 0.000000e+00 : f32
      %12 = vector.broadcast %cst_10 : f32 to vector<8x128xf32>
      %c0_11 = arith.constant 0 : index
      %c0_12 = arith.constant 0 : index
      %13 = vector.load %arg7[%c0_11, %c0_12] : memref<8x128xf32, #tpu.memory_space<vmem>>, vector<8x128xf32>
      tpu.vector_store %arg7[%c0_11, %c0_12], %12 {strides = array<i32>} : memref<8x128xf32, #tpu.memory_space<vmem>>, vector<8x128xf32>,
    } else {
    }
    %c0 = arith.constant 0 : index
    %c0_1 = arith.constant 0 : index
    %3 = vector.load %arg7[%c0, %c0_1] : memref<8x128xf32, #tpu.memory_space<vmem>>, vector<8x128xf32>
    %c0_2 = arith.constant 0 : index
    %c0_3 = arith.constant 0 : index
    %4 = vector.load %arg3[%c0_2, %c0_3] : memref<8x128xf32, #tpu.memory_space<vmem>>, vector<8x128xf32>
    %c0_4 = arith.constant 0 : index
    %c0_5 = arith.constant 0 : index
    %5 = vector.load %arg4[%c0_4, %c0_5] : memref<128x128xf32, #tpu.memory_space<vmem>>, vector<128x128xf32>
    %cst = arith.constant dense<0.000000e+00> : vector<8x128xf32>
    %6 = tpu.matmul %4, %5, %cst {dimension_numbers = #tpu.dot_dimension_numbers<[1], [0], [0], [1], [0, 0, 1, 1], [], []>} : vector<8x128xf32>, vector<128x128xf32>, vector<8x128xf32> -> vector<8x128xf32>
    %7 = arith.addf %3, %6 : vector<8x128xf32>
    %c0_6 = arith.constant 0 : index
    %c0_7 = arith.constant 0 : index
    %8 = vector.load %arg7[%c0_6, %c0_7] : memref<8x128xf32, #tpu.memory_space<vmem>>, vector<8x128xf32>
    tpu.vector_store %arg7[%c0_6, %c0_7], %7 {strides = array<i32>} : memref<8x128xf32, #tpu.memory_space<vmem>>, vector<8x128xf32>,
    %c0_i32_8 = arith.constant 0 : i32
    %9 = arith.cmpi eq, %arg2, %c0_i32_8 : i32
    %10 = arith.extui %9 : i1 to i32
    %c0_i32_9 = arith.constant 0 : i32
    %11 = arith.cmpi ne, %10, %c0_i32_9 : i32
    scf.if %11 {
      %c0_10 = arith.constant 0 : index
      %c0_11 = arith.constant 0 : index
      %12 = vector.load %arg7[%c0_10, %c0_11] : memref<8x128xf32, #tpu.memory_space<vmem>>, vector<8x128xf32>
      %c0_12 = arith.constant 0 : index
      %c0_13 = arith.constant 0 : index
      %13 = vector.load %arg5[%c0_12, %c0_13] : memref<1x128xf32, #tpu.memory_space<vmem>>, vector<1x128xf32>
      %14 = vector.broadcast %13 : vector<1x128xf32> to vector<8x128xf32>
      %15 = arith.addf %12, %14 : vector<8x128xf32>
      %cst_14 = arith.constant 0.000000e+00 : f32
      %16 = vector.broadcast %cst_14 : f32 to vector<8x128xf32>
      %17 = arith.maximumf %15, %16 : vector<8x128xf32>
      %18 = math.absf %15 : vector<8x128xf32>
      %cst_15 = arith.constant 0.000000e+00 : f32
      %19 = vector.broadcast %cst_15 : f32 to vector<8x128xf32>
      %20 = arith.subf %19, %18 : vector<8x128xf32>
      %21 = math.exp %20 : vector<8x128xf32>
      %cst_16 = arith.constant 1.000000e+00 : f32
      %22 = vector.broadcast %cst_16 : f32 to vector<8x128xf32>
      %23 = arith.addf %22, %21 : vector<8x128xf32>
      %24 = math.log %23 : vector<8x128xf32>
      %25 = arith.addf %17, %24 : vector<8x128xf32>
      %cst_17 = arith.constant 0.434294492 : f32
      %26 = vector.broadcast %cst_17 : f32 to vector<8x128xf32>
      %27 = arith.mulf %25, %26 : vector<8x128xf32>
      %c0_18 = arith.constant 0 : index
      %c0_19 = arith.constant 0 : index
      %28 = vector.load %arg6[%c0_18, %c0_19] : memref<8x128xf32, #tpu.memory_space<vmem>>, vector<8x128xf32>
      tpu.vector_store %arg6[%c0_18, %c0_19], %27 {strides = array<i32>} : memref<8x128xf32, #tpu.memory_space<vmem>>, vector<8x128xf32>,
    } else {
    }
    return
  }
  func.func @transform_0(%arg0: i32, %arg1: i32, %arg2: i32) -> (i32, i32) {
    %c0_i32 = arith.constant 0 : i32
    return %arg0, %arg2 : i32, i32
  }
  func.func @transform_1(%arg0: i32, %arg1: i32, %arg2: i32) -> (i32, i32) {
    %c0_i32 = arith.constant 0 : i32
    return %arg2, %arg1 : i32, i32
  }
  func.func @transform_2(%arg0: i32, %arg1: i32, %arg2: i32) -> (i32, i32) {
    %c0_i32 = arith.constant 0 : i32
    %c0_i32_0 = arith.constant 0 : i32
    return %c0_i32, %arg1 : i32, i32
  }
  func.func @transform_3(%arg0: i32, %arg1: i32, %arg2: i32) -> (i32, i32) {
    %c0_i32 = arith.constant 0 : i32
    return %arg0, %arg1 : i32, i32
  }
}

</mosaic_0001>

<llo_original>
// kernel: tpu_custom_call.1
$region0: #{tpu_custom_call.1}
  #allocation0 [shape = 'u32[]', space=smem, size = 0x4, offset = 0x4, fixed_abs, tag = 'smem constant byte address 0x4 - core index']
  #allocation1 [shape = 'u32[144,128]{1,0:T(1,128)}', space=vmem, size = 0x12000, scoped, tag = 'internal scratch']
  #allocation2 [shape = 'f32[8,128]{1,0:T(8,128)}', space=vmem, size = 0x1000, scoped, tag = 'scratch operand']
  %s0 = inlined_call_operand.hbm [shape: f32[10,128], index: 0, kind: input, shape index: {}]
  %s1 = inlined_call_operand.hbm [shape: f32[128,128], index: 1, kind: input, shape index: {}]
  %s2 = inlined_call_operand.vmem [shape: f32[1,128], index: 2, kind: input, shape index: {}]
  %s3 = inlined_call_operand.hbm [shape: f32[10,128], index: 3, kind: output, shape index: {}]
  %s4 = sld [smem:[#allocation0]]
  $region61: #{tpu_custom_call.1} parent=0
    _
  %s6 = ssub.s32 1, %s4
  %s7 = scalar_select 0, %s6, %s4
  $region1: #{tpu_custom_call.1} parent=0
    #allocation3 [shape = 'u8[8192]{0}', space=vmem, size = 0x2000, scoped, tag = 'input window, operand 0']
    #allocation4 [shape = 's32[2]{0}', space=sflag, size = 0x8, scoped, tag = 'scoped memory for tpu_custom_call.1']
    #allocation5 [shape = 's32[2]{0}', space=sflag, size = 0x8, scoped, tag = 'scoped memory for tpu_custom_call.1']
    #allocation6 [shape = 'u8[65536]{0}', space=vmem, size = 0x10000, scoped, tag = 'input window, operand 1, single buffered']
    #allocation7 [shape = 's32[1]{0}', space=sflag, size = 0x4, scoped, tag = 'scoped memory for tpu_custom_call.1']
    #allocation8 [shape = 'u8[8192]{0}', space=vmem, size = 0x2000, scoped, tag = 'output window, operand 0']
    %8 = vsyncpa [#allocation4], 0
    %s9 = scalar_lea.sflag [#allocation4], 1
    %10 = vsyncpa %s9, 0
    %11 = vsyncpa [#allocation7], 0
    %12 = vsyncpa [#allocation5], 0
    %s13 = scalar_lea.sflag [#allocation5], 1
    %14 = vsyncpa %s13, 0
    loop: start=0, step=1, limit=4
    $region2: #{tpu_custom_call.1} parent=1 // loop_pre_header
      _
    $region3: #{tpu_custom_call.1} parent=1 // loop_header
      %s16 = sphi 0, %s20
      %p17 = scmp.ge.s32.totalorder %s16, 4
      %s23 = sphi 0, %s42
      %s24 = sphi 0, %s38
      %s25 = sphi 0, %s34
      %s26 = sphi 0, %s23
      %s27 = sphi 0, %s24
      %s28 = sphi 0, %s25
      %s29 = sphi 0, %s26
      %s30 = sphi 0, %s27
      %s31 = sphi 0, %s28
      %s47 = sphi 0, %s49
      %s50 = sphi 0, %s47
      %s51 = sphi 0, %s50
      %s67 = sphi 0, %s51
      %s75 = sphi 0, %s77
      %s78 = sphi 0, %s75
      %s79 = sphi 0, %s78
      %s95 = sphi 0, %s79
      %s101 = sphi 0, %s103
      %s104 = sphi 0, %s101
      %s105 = sphi 0, %s104
      %s121 = sphi 0, %s105
      %s129 = sphi 0, %s131
      %s132 = sphi 0, %s129
      %s133 = sphi 0, %s132
      %s149 = sphi 0, %s133
    $region4: #{tpu_custom_call.1} parent=1 // loop_header_branch
      %19 = sbr.rel (%p17) target = $region8
    $region5: #{tpu_custom_call.1} parent=1 // loop_body
      %s21 = ssub.s32 %s16, 1
      %s22 = ssub.s32 %s16, 2
      %s32 = sadd.s32 1, %s25
      %p33 = scmp.ge.s32.totalorder %s32, 1
      %s34 = scalar_select %p33, 0, %s32
      %s35 = sadd.s32 1, %s24
      %s36 = scalar_select %p33, %s35, %s24
      %p37 = scmp.ge.s32.totalorder %s36, 1
      %s38 = scalar_select %p37, 0, %s36
      %s39 = sadd.s32 1, %s23
      %s40 = scalar_select %p37, %s39, %s23
      %p41 = scmp.ge.s32.totalorder %s40, 2
      %s42 = scalar_select %p41, 0, %s40
      %s43 = ssub.s32 %s23, %s42
      %s44 = ssub.s32 %s25, %s34
      %s45 = sor.u32 %s43, %s44
      %p46 = scmp.eq.s32.totalorder %s45, 0
      %s48 = sadd.s32 %s47, 1
      %s49 = scalar_select %p46, %s47, %s48
      %p52 = pneg %p46
      %p53 = scmp.eq.s32.totalorder %s16, 1
      %p54 = por %p52, %p53
      %p55 = scmp.ne.s32.totalorder %s47, %s50
      %p56 = scmp.eq.s32.totalorder %s16, 0
      %p57 = por %p55, %p56
      %p58 = scmp.ne.s32.totalorder %s47, %s50
      %p59 = scmp.eq.s32.totalorder %s21, 1
      %p60 = por %p58, %p59
      %p61 = scmp.ne.s32.totalorder %s50, %s51
      %p62 = scmp.eq.s32.totalorder %s21, 0
      %p63 = por %p61, %p62
      %p64 = scmp.ne.s32.totalorder %s50, %s51
      %p65 = scmp.eq.s32.totalorder %s22, 1
      %p66 = por %p64, %p65
      %p68 = scmp.ne.s32.totalorder %s51, %s67
      %p69 = scmp.eq.s32.totalorder %s22, 0
      %p70 = por %p68, %p69
      %s71 = ssub.s32 %s25, %s34
      %s72 = ssub.s32 %s24, %s38
      %s73 = sor.u32 %s71, %s72
      %p74 = scmp.eq.s32.totalorder %s73, 0
      %s76 = sadd.s32 %s75, 1
      %s77 = scalar_select %p74, %s75, %s76
      %p80 = pneg %p74
      %p81 = scmp.eq.s32.totalorder %s16, 1
      %p82 = por %p80, %p81
      %p83 = scmp.ne.s32.totalorder %s75, %s78
      %p84 = scmp.eq.s32.totalorder %s16, 0
      %p85 = por %p83, %p84
      %p86 = scmp.ne.s32.totalorder %s75, %s78
      %p87 = scmp.eq.s32.totalorder %s21, 1
      %p88 = por %p86, %p87
      %p89 = scmp.ne.s32.totalorder %s78, %s79
      %p90 = scmp.eq.s32.totalorder %s21, 0
      %p91 = por %p89, %p90
      %p92 = scmp.ne.s32.totalorder %s78, %s79
      %p93 = scmp.eq.s32.totalorder %s22, 1
      %p94 = por %p92, %p93
      %p96 = scmp.ne.s32.totalorder %s79, %s95
      %p97 = scmp.eq.s32.totalorder %s22, 0
      %p98 = por %p96, %p97
      %s99 = ssub.s32 %s24, %s38
      %p100 = scmp.eq.s32.totalorder %s99, 0
      %s102 = sadd.s32 %s101, 1
      %s103 = scalar_select %p100, %s101, %s102
      %p106 = pneg %p100
      %p107 = scmp.eq.s32.totalorder %s16, 1
      %p108 = por %p106, %p107
      %p109 = scmp.ne.s32.totalorder %s101, %s104
      %p110 = scmp.eq.s32.totalorder %s16, 0
      %p111 = por %p109, %p110
      %p112 = scmp.ne.s32.totalorder %s101, %s104
      %p113 = scmp.eq.s32.totalorder %s21, 1
      %p114 = por %p112, %p113
      %p115 = scmp.ne.s32.totalorder %s104, %s105
      %p116 = scmp.eq.s32.totalorder %s21, 0
      %p117 = por %p115, %p116
      %p118 = scmp.ne.s32.totalorder %s104, %s105
      %p119 = scmp.eq.s32.totalorder %s22, 1
      %p120 = por %p118, %p119
      %p122 = scmp.ne.s32.totalorder %s105, %s121
      %p123 = scmp.eq.s32.totalorder %s22, 0
      %p124 = por %p122, %p123
      %s125 = ssub.s32 %s23, %s42
      %s126 = ssub.s32 %s24, %s38
      %s127 = sor.u32 %s125, %s126
      %p128 = scmp.eq.s32.totalorder %s127, 0
      %s130 = sadd.s32 %s129, 1
      %s131 = scalar_select %p128, %s129, %s130
      %p134 = pneg %p128
      %p135 = scmp.eq.s32.totalorder %s16, 1
      %p136 = por %p134, %p135
      %p137 = scmp.ne.s32.totalorder %s129, %s132
      %p138 = scmp.eq.s32.totalorder %s16, 0
      %p139 = por %p137, %p138
      %p140 = scmp.ne.s32.totalorder %s129, %s132
      %p141 = scmp.eq.s32.totalorder %s21, 1
      %p142 = por %p140, %p141
      %p143 = scmp.ne.s32.totalorder %s132, %s133
      %p144 = scmp.eq.s32.totalorder %s21, 0
      %p145 = por %p143, %p144
      %p146 = scmp.ne.s32.totalorder %s132, %s133
      %p147 = scmp.eq.s32.totalorder %s22, 1
      %p148 = por %p146, %p147
      %p150 = scmp.ne.s32.totalorder %s133, %s149
      %p151 = scmp.eq.s32.totalorder %s22, 0
      %p152 = por %p150, %p151
      %p153 = scmp.le.s32.totalorder 1, %s16
      %p154 = scmp.lt.s32.totalorder %s16, 3
      %p155 = pnand %p153, %p154
      %p156 = pneg %p155
      // Predicated region
      $region9: #{tpu_custom_call.1} parent=5 // pred_check
        _
      $region10: #{tpu_custom_call.1} parent=5 // pred_check_branch
        %158 = sbr.rel (%p155) target = $region12
      $region11: #{tpu_custom_call.1} parent=5 // pred_region
        %s159 = ssub.s32 %s16, 1
        // Predicated region
        $region13: #{tpu_custom_call.1} parent=11 // pred_check
          %p160 = pneg %p91
        $region14: #{tpu_custom_call.1} parent=11 // pred_check_branch
          %162 = sbr.rel (%p160) target = $region16
        $region15: #{tpu_custom_call.1} parent=11 // pred_region
          %s163 = smul.u32 16, %s28
          %s165 = ssub.s32 2048, 2048
          %166 = vsyncadd [#allocation7], %s165
          %s167 = sadd.s32 %s27, %s163
          %s168 = smul.addr %s167, 128
          %s169 = scalar_lea.hbm %s1, %s168
          %s170 = sshll.u32 [#allocation6], 4
          %s171 = int_to_ptr.vmem [resolvable:$true] %s170
          %176 = dma.hbm_to_vmem [thread:$0]  %s169, 2048, %s171, [#allocation7], 128, 128, 8
        $region16: #{tpu_custom_call.1} parent=11 // pred_fallthru
          _
        // Predicated region
        $region17: #{tpu_custom_call.1} parent=11 // pred_check
          %p177 = pneg %p117
        $region18: #{tpu_custom_call.1} parent=11 // pred_check_branch
          %179 = sbr.rel (%p177) target = $region20
        $region19: #{tpu_custom_call.1} parent=11 // pred_region
          %p180 = scmp.lt.s32.totalorder %s27, 0
          %s181 = scalar_select %p180, %s27, 0
          %s182 = scalar_lea.vmem %s2, %s181
        $region20: #{tpu_custom_call.1} parent=11 // pred_fallthru
          _
      $region12: #{tpu_custom_call.1} parent=5 // pred_fallthru
        _
      %p183 = scmp.lt.s32.totalorder %s16, 2
      // Predicated region
      $region21: #{tpu_custom_call.1} parent=5 // pred_check
        %p184 = pneg %p183
      $region22: #{tpu_custom_call.1} parent=5 // pred_check_branch
        %186 = sbr.rel (%p184) target = $region24
      $region23: #{tpu_custom_call.1} parent=5 // pred_region
        // Predicated region
        $region25: #{tpu_custom_call.1} parent=23 // pred_check
          %p187 = pneg %p57
        $region26: #{tpu_custom_call.1} parent=23 // pred_check_branch
          %189 = sbr.rel (%p187) target = $region28
        $region27: #{tpu_custom_call.1} parent=23 // pred_region
          %s190 = sand.u32 %s47, 1
          %s191 = scalar_lea.sflag [#allocation4], %s190
          %s192 = sand.u32 %s47, 1
          %s193 = smul.addr %s192, 8
          %s194 = scalar_lea.vmem [#allocation3], %s193
          %s196 = ssub.s32 128, 128
          %197 = vsyncadd %s191, %s196
          %s198 = sadd.s32 %s25, %s23
          %s199 = smul.addr %s198, 128
          %s200 = scalar_lea.hbm %s0, %s199
          %s202 = sshll.u32 %s194, 4
          %s203 = int_to_ptr.vmem [resolvable:$true] %s202
          %205 = dma.hbm_to_vmem [thread:$0]  %s200, 128, %s203, %s191
        $region28: #{tpu_custom_call.1} parent=23 // pred_fallthru
          _
      $region24: #{tpu_custom_call.1} parent=5 // pred_fallthru
        _
      %p206 = scmp.le.s32.totalorder 1, %s16
      %p207 = scmp.lt.s32.totalorder %s16, 3
      %p208 = pnand %p206, %p207
      %p209 = pneg %p208
      // Predicated region
      $region29: #{tpu_custom_call.1} parent=5 // pred_check
        _
      $region30: #{tpu_custom_call.1} parent=5 // pred_check_branch
        %211 = sbr.rel (%p208) target = $region32
      $region31: #{tpu_custom_call.1} parent=5 // pred_region
        %s212 = ssub.s32 %s16, 1
        %s213 = sand.u32 %s50, 1
        %s214 = scalar_lea.sflag [#allocation4], %s213
        %s215 = sand.u32 %s50, 1
        %s216 = smul.addr %s215, 8
        %s217 = scalar_lea.vmem [#allocation3], %s216
        // Predicated region
        $region33: #{tpu_custom_call.1} parent=31 // pred_check
          %p218 = pneg %p63
        $region34: #{tpu_custom_call.1} parent=31 // pred_check_branch
          %220 = sbr.rel (%p218) target = $region36
        $region35: #{tpu_custom_call.1} parent=31 // pred_region
          %221 = dma.done %s214, 128
        $region36: #{tpu_custom_call.1} parent=31 // pred_fallthru
          _
        // Predicated region
        $region37: #{tpu_custom_call.1} parent=31 // pred_check
          %p222 = pneg %p91
        $region38: #{tpu_custom_call.1} parent=31 // pred_check_branch
          %224 = sbr.rel (%p222) target = $region40
        $region39: #{tpu_custom_call.1} parent=31 // pred_region
          %225 = dma.done [#allocation7], 2048
        $region40: #{tpu_custom_call.1} parent=31 // pred_fallthru
          _
        %s226 = sand.u32 %s50, 1
        %s227 = scalar_lea.sflag [#allocation4], %s226
        %s228 = sand.u32 %s50, 1
        %s229 = smul.addr %s228, 8
        %s230 = scalar_lea.vmem [#allocation3], %s229
        %p231 = pneg %p63
        %p232 = pneg %p60
        %p233 = pneg %p91
        %p234 = pneg %p88
        %p235 = scmp.lt.s32.totalorder %s27, 0
        %s236 = scalar_select %p235, %s27, 0
        %s237 = scalar_lea.vmem %s2, %s236
        %p238 = pneg %p117
        %p239 = pneg %p114
        %p240 = pneg %p145
        %p241 = pneg %p142
        %s242 = sand.u32 %s132, 1
        %s243 = scalar_lea.sflag [#allocation5], %s242
        %s244 = sand.u32 %s132, 1
        %s245 = smul.addr %s244, 8
        %s246 = scalar_lea.vmem [#allocation8], %s245
        %s247 = smul.u32 16, %s28
        %p248 = scmp.lt.s32.totalorder %s27, 0
        %s249 = scalar_select %p248, %s27, 0
        %s250 = scalar_lea.vmem %s2, %s249
        %p251 = scmp.eq.s32.totalorder %s28, 0
        // Predicated region
        $region41: #{tpu_custom_call.1} parent=31 // pred_check
          %p252 = pneg %p251
        $region42: #{tpu_custom_call.1} parent=31 // pred_check_branch
          %254 = sbr.rel (%p252) target = $region44
        $region43: #{tpu_custom_call.1} parent=31 // pred_region
          %255 = vst [vmem:[#allocation2] sm:$0xff] 0.0
        $region44: #{tpu_custom_call.1} parent=31 // pred_fallthru
          _
        %v256 = vld [vmem:[#allocation2] sm:$0xff]
        %v257 = vld [vmem:[%s217] sm:$0xff]
        %v258 = vld [vmem:[#allocation6] sm:$0xff]
        %v259 = vld [vmem:[#allocation6 + $0x8] sm:$0xff]
        %v260 = vld [vmem:[#allocation6 + $0x10] sm:$0xff]
        %v261 = vld [vmem:[#allocation6 + $0x18] sm:$0xff]
        %v262 = vld [vmem:[#allocation6 + $0x20] sm:$0xff]
        %v263 = vld [vmem:[#allocation6 + $0x28] sm:$0xff]
        %v264 = vld [vmem:[#allocation6 + $0x30] sm:$0xff]
        %v265 = vld [vmem:[#allocation6 + $0x38] sm:$0xff]
        %v266 = vld [vmem:[#allocation6 + $0x40] sm:$0xff]
        %v267 = vld [vmem:[#allocation6 + $0x48] sm:$0xff]
        %v268 = vld [vmem:[#allocation6 + $0x50] sm:$0xff]
        %v269 = vld [vmem:[#allocation6 + $0x58] sm:$0xff]
        %v270 = vld [vmem:[#allocation6 + $0x60] sm:$0xff]
        %v271 = vld [vmem:[#allocation6 + $0x68] sm:$0xff]
        %v272 = vld [vmem:[#allocation6 + $0x70] sm:$0xff]
        %v273 = vld [vmem:[#allocation6 + $0x78] sm:$0xff]
        %274 = vmatprep.subr.mxu0 0.0
        %275 = vmatpush1.msra.mxu0 %v258
        %276 = vmatprep.subr.mxu0 0.0
        %277 = vmatpush1.msra.mxu0 %v259
        %278 = vmatprep.subr.mxu0 0.0
        %279 = vmatpush1.msra.mxu0 %v260
        %280 = vmatprep.subr.mxu0 0.0
        %281 = vmatpush1.msra.mxu0 %v261
        %282 = vmatprep.subr.mxu0 0.0
        %283 = vmatpush1.msra.mxu0 %v262
        %284 = vmatprep.subr.mxu0 0.0
        %285 = vmatpush1.msra.mxu0 %v263
        %286 = vmatprep.subr.mxu0 0.0
        %287 = vmatpush1.msra.mxu0 %v264
        %288 = vmatprep.subr.mxu0 0.0
        %289 = vmatpush1.msra.mxu0 %v265
        %290 = vmatprep.subr.mxu0 0.0
        %291 = vmatpush1.msra.mxu0 %v266
        %292 = vmatprep.subr.mxu0 0.0
        %293 = vmatpush1.msra.mxu0 %v267
        %294 = vmatprep.subr.mxu0 0.0
        %295 = vmatpush1.msra.mxu0 %v268
        %296 = vmatprep.subr.mxu0 0.0
        %297 = vmatpush1.msra.mxu0 %v269
        %298 = vmatprep.subr.mxu0 0.0
        %299 = vmatpush1.msra.mxu0 %v270
        %300 = vmatprep.subr.mxu0 0.0
        %301 = vmatpush1.msra.mxu0 %v271
        %302 = vmatprep.subr.mxu0 0.0
        %303 = vmatpush1.msra.mxu0 %v272
        %304 = vmatprep.subr.mxu0 0.0
        %305 = vmatpush1.msra.mxu0 %v273
        %306 = vmatprep.subr.mxu0 0.0
        %307 = vmatpush1.msra.mxu0 0.0
        %308 = vmatprep.subr.mxu0 0.0
        %309 = vmatpush1.msra.mxu0 0.0
        %310 = vmatprep.subr.mxu0 0.0
        %311 = vmatpush1.msra.mxu0 0.0
        %312 = vmatprep.subr.mxu0 0.0
        %313 = vmatpush1.msra.mxu0 0.0
        %314 = vmatprep.subr.mxu0 0.0
        %315 = vmatpush1.msra.mxu0 0.0
        %316 = vmatprep.subr.mxu0 0.0
        %317 = vmatpush1.msra.mxu0 0.0
        %318 = vmatprep.subr.mxu0 0.0
        %319 = vmatpush1.msra.mxu0 0.0
        %320 = vmatprep.subr.mxu0 0.0
        %321 = vmatpush1.msra.mxu0 0.0
        %322 = vmatprep.subr.mxu0 0.0
        %323 = vmatpush1.msra.mxu0 0.0
        %324 = vmatprep.subr.mxu0 0.0
        %325 = vmatpush1.msra.mxu0 0.0
        %326 = vmatprep.subr.mxu0 0.0
        %327 = vmatpush1.msra.mxu0 0.0
        %328 = vmatprep.subr.mxu0 0.0
        %329 = vmatpush1.msra.mxu0 0.0
        %330 = vmatprep.subr.mxu0 0.0
        %331 = vmatpush1.msra.mxu0 0.0
        %332 = vmatprep.subr.mxu0 0.0
        %333 = vmatpush1.msra.mxu0 0.0
        %334 = vmatprep.subr.mxu0 0.0
        %335 = vmatpush1.msra.mxu0 0.0
        %336 = vmatprep.subr.mxu0 0.0
        %337 = vmatpush1.msra.mxu0 0.0
        %338 = vmatprep.mubr.f32.mxu0 0.0
        %339 = vmatmul.mubr.f32.gmra.mrb[0].mxu0 %v257
        %v340 = vpop.f32.mrb[0].mxu0
        %v341 = vadd.f32 0.0, %v340
        %v342 = vpop.f32.mrb[0].mxu0
        %343 = vdwg.mxu0
        %v344 = vadd.f32 %v256, %v341
        %345 = vst [vmem:[#allocation2] sm:$0xff] %v344
        // Predicated region
        $region45: #{tpu_custom_call.1} parent=31 // pred_check
          %p346 = pneg %p251
        $region46: #{tpu_custom_call.1} parent=31 // pred_check_branch
          %348 = sbr.rel (%p346) target = $region48
        $region47: #{tpu_custom_call.1} parent=31 // pred_region
          %v349 = vld [vmem:[#allocation2] sm:$0xff]
          %v350 = vld [vmem:[%s250] sm:$0x1]
          %v352 = vlaneseq
          %v353 = vshrl.u32 %v352, 7
          %v354 = vsub.s32 0, %v353
          %v355 = vrot.slane %v350, %v354
          %v357 = vadd.f32 %v349, %v355
          %v358 = vmax.f32 %v357, 0.0
          %v359 = vand.u32 2147483647, %v357
          %v360 = vsub.f32 0.0, %v359
          %v361 = vmul.f32 %v360, 1.442695
          %v362 = vpow.pop %v361
          %v363 = vadd.f32 %v362, 1.0
          %v364 = vlog2.pop %v363
          %v365 = vmul.f32 %v364, 0.6931472
          %v366 = vadd.f32 %v358, %v365
          %v367 = vmul.f32 %v366, 0.4342945
          %368 = vst [vmem:[%s246] sm:$0xff] %v367
        $region48: #{tpu_custom_call.1} parent=31 // pred_fallthru
          _
        %s369 = sand.u32 %s132, 1
        %s370 = scalar_lea.sflag [#allocation5], %s369
        %s371 = sand.u32 %s132, 1
        %s372 = smul.addr %s371, 8
        %s373 = scalar_lea.vmem [#allocation8], %s372
        // Predicated region
        $region49: #{tpu_custom_call.1} parent=31 // pred_check
          %p374 = pneg %p142
        $region50: #{tpu_custom_call.1} parent=31 // pred_check_branch
          %376 = sbr.rel (%p374) target = $region52
        $region51: #{tpu_custom_call.1} parent=31 // pred_region
          %s378 = ssub.s32 128, 128
          %379 = vsyncadd %s370, %s378
          %s380 = sadd.s32 %s27, %s26
          %s381 = smul.addr %s380, 128
          %s382 = scalar_lea.hbm %s3, %s381
          %s384 = sshll.u32 %s373, 4
          %s385 = int_to_ptr.vmem [resolvable:$true] %s384
          %387 = dma.vmem_to_hbm [thread:$0]  %s385, 128, %s382, %s370
        $region52: #{tpu_custom_call.1} parent=31 // pred_fallthru
          _
      $region32: #{tpu_custom_call.1} parent=5 // pred_fallthru
        _
      %p388 = scmp.le.s32.totalorder 2, %s16
      // Predicated region
      $region53: #{tpu_custom_call.1} parent=5 // pred_check
        %p389 = pneg %p388
      $region54: #{tpu_custom_call.1} parent=5 // pred_check_branch
        %391 = sbr.rel (%p389) target = $region56
      $region55: #{tpu_custom_call.1} parent=5 // pred_region
        %s392 = ssub.s32 %s16, 2
        // Predicated region
        $region57: #{tpu_custom_call.1} parent=55 // pred_check
          %p393 = pneg %p148
        $region58: #{tpu_custom_call.1} parent=55 // pred_check_branch
          %395 = sbr.rel (%p393) target = $region60
        $region59: #{tpu_custom_call.1} parent=55 // pred_region
          %s396 = sand.u32 %s133, 1
          %s397 = scalar_lea.sflag [#allocation5], %s396
          %s398 = sand.u32 %s133, 1
          %s399 = smul.addr %s398, 8
          %s400 = scalar_lea.vmem [#allocation8], %s399
          %401 = dma.done %s397, 128
        $region60: #{tpu_custom_call.1} parent=55 // pred_fallthru
          _
      $region56: #{tpu_custom_call.1} parent=5 // pred_fallthru
        _
    $region6: #{tpu_custom_call.1} parent=1 // loop_footer
      %s20 = sadd.s32 1, %s16
    $region7: #{tpu_custom_call.1} parent=1 // loop_footer_branch
      %15 = sbr.rel target = $region3
    $region8: #{tpu_custom_call.1} parent=1 // loop_exit
      _
    %402 = vsyncpa [#allocation4], 1
    %s403 = scalar_lea.sflag [#allocation4], 1
    %404 = vsyncpa %s403, 1
    %405 = vsyncpa [#allocation7], 1
    %406 = vsyncpa [#allocation5], 1
    %s407 = scalar_lea.sflag [#allocation5], 1
    %408 = vsyncpa %s407, 1

</llo_original>
